<compile_context>
chip_gen: v7x
topology: tpu7x:2x2x1
jax: 0.10.0
libtpu: 0.0.40
codegen_flags: <defaults>
</compile_context>

<pallas_src>
import jax
import jax.numpy as jnp
from jax.experimental import pallas as pl
from jax.experimental.pallas import tpu as pltpu

EPS = 1e-12
F32 = jnp.float32
BF16 = jnp.bfloat16


def _round_up(x, m):
    return ((x + m - 1) // m) * m


# --------------------------------------------------------------------------
# generic linear: [M, K] @ [K, N] + [N], tiled over M, bf16 operands
# --------------------------------------------------------------------------
def _linear_kernel(x_ref, w_ref, b_ref, o_ref):
    o_ref[...] = (jnp.dot(x_ref[...], w_ref[...],
                          preferred_element_type=F32) + b_ref[...])


def pallas_linear(x, w, b, tm=256):
    M, K = x.shape
    N = w.shape[1]
    xb = x.astype(BF16)
    wb = w.astype(BF16)
    b2 = b.reshape(1, N).astype(F32)
    tm_eff = min(tm, _round_up(M, 16))
    Mp = _round_up(M, tm_eff)
    if Mp != M:
        xb = jnp.pad(xb, ((0, Mp - M), (0, 0)))
    out = pl.pallas_call(
        _linear_kernel,
        out_shape=jax.ShapeDtypeStruct((Mp, N), F32),
        grid=(Mp // tm_eff,),
        in_specs=[pl.BlockSpec((tm_eff, K), lambda i: (i, 0)),
                  pl.BlockSpec((K, N), lambda i: (0, 0)),
                  pl.BlockSpec((1, N), lambda i: (0, 0))],
        out_specs=pl.BlockSpec((tm_eff, N), lambda i: (i, 0)),
        compiler_params=pltpu.CompilerParams(
            dimension_semantics=("parallel",)),
    )(xb, wb, b2)
    return out[:M] if Mp != M else out


# --------------------------------------------------------------------------
# GRU encoder, grid over time.  gi (= x@Wih + bih) is precomputed outside;
# per step only gh = h@Whh stays (MXU, bf16 weights).  Masked carry reproduces
# pack_padded behaviour: padded hiddens are zero, enc = hidden at last valid t.
# --------------------------------------------------------------------------
def _gru_encoder_kernel(gi_ref, m_ref, whh_ref, bhh_ref, hid_ref, enc_ref,
                        h_scr):
    t = pl.program_id(0)
    H = whh_ref.shape[0]

    @pl.when(t == 0)
    def _():
        h_scr[...] = jnp.zeros_like(h_scr)

    gi = gi_ref[0]                              # [bs, 3H] f32 (hoisted)
    m = m_ref[0]                                # [bs, 1]
    h = h_scr[...]
    gh = jnp.dot(h.astype(BF16), whh_ref[...],
                 preferred_element_type=F32) + bhh_ref[...]
    r = jax.nn.sigmoid(gi[:, :H] + gh[:, :H])
    u = jax.nn.sigmoid(gi[:, H:2 * H] + gh[:, H:2 * H])
    n = jnp.tanh(gi[:, 2 * H:] + r * gh[:, 2 * H:])
    h_new = (1.0 - u) * n + u * h
    hid_ref[0] = h_new * m
    h_scr[...] = m * h_new + (1.0 - m) * h

    @pl.when(t == pl.num_programs(0) - 1)
    def _():
        enc_ref[...] = h_scr[...]


def gru_encode(gi_bsf, mask_bs, whh, bhh):
    bs, S, H3 = gi_bsf.shape
    H = whh.shape[0]
    gi_s = jnp.transpose(gi_bsf, (1, 0, 2))          # [S, bs, 3H]
    m_s = jnp.transpose(mask_bs, (1, 0))[:, :, None]  # [S, bs, 1]
    hiddens_s, encs = pl.pallas_call(
        _gru_encoder_kernel,
        out_shape=(jax.ShapeDtypeStruct((S, bs, H), F32),
                   jax.ShapeDtypeStruct((bs, H), F32)),
        grid=(S,),
        in_specs=[pl.BlockSpec((1, bs, H3), lambda t: (t, 0, 0)),
                  pl.BlockSpec((1, bs, 1), lambda t: (t, 0, 0)),
                  pl.BlockSpec((H, H3), lambda t: (0, 0)),
                  pl.BlockSpec((1, H3), lambda t: (0, 0))],
        out_specs=[pl.BlockSpec((1, bs, H), lambda t: (t, 0, 0)),
                   pl.BlockSpec((bs, H), lambda t: (0, 0))],
        scratch_shapes=[pltpu.VMEM((bs, H), F32)],
        compiler_params=pltpu.CompilerParams(
            dimension_semantics=("arbitrary",)),
    )(gi_s, m_s, whh.astype(BF16), bhh.reshape(1, -1).astype(F32))
    return encs, jnp.transpose(hiddens_s, (1, 0, 2))


# --------------------------------------------------------------------------
# _compute_ws_state: FFNN scoring + masked softmax over the group axis
# + weighted pooling (fused)
# --------------------------------------------------------------------------
def _ws_kernel(states_ref, mask_ref, w1_ref, b1_ref, w2_ref, b2_ref,
               ctx_ref, wts_ref):
    states = states_ref[...]            # [G, L, D] f32
    mask = mask_ref[...]                # [G, L, 1]
    G, L, D = states.shape
    flat = states.reshape(G * L, D)
    h = jnp.tanh(jnp.dot(flat.astype(BF16), w1_ref[...],
                         preferred_element_type=F32) + b1_ref[...])
    sc = (jnp.dot(h, w2_ref[...], preferred_element_type=F32)
          + b2_ref[...]).reshape(G, L, 1)
    sc = jnp.where(mask > 0, sc, jnp.full_like(sc, -1e9))
    sc = sc - sc.max(axis=1, keepdims=True)
    ex = jnp.exp(sc) * mask
    wts = ex * pl.reciprocal(ex.sum(axis=1, keepdims=True) + EPS, approx=True)
    wts_ref[...] = wts
    ctx_ref[...] = (states * wts).sum(axis=1)


def weighted_state(states, mask, w1, b1, w2, b2):
    G, L, D = states.shape
    ctx, wts = pl.pallas_call(
        _ws_kernel,
        out_shape=(jax.ShapeDtypeStruct((G, D), F32),
                   jax.ShapeDtypeStruct((G, L, 1), F32)),
    )(states.astype(F32), mask[:, :, None].astype(F32),
      w1.astype(BF16), b1.reshape(1, -1).astype(F32),
      w2.astype(F32), b2.reshape(1, -1).astype(F32))
    return ctx, wts


# --------------------------------------------------------------------------
# Fused pointer-generator GRU decoder step (grid over time).
# Inputs are pre-projected (emb@W_e + z@W_z + bih and emb part of copy gate);
# per step only cont@W_c, h@Whh, attention, generator softmax (denominator
# only leaves the MXU), copy gate.  The pointer mixture is evaluated at the
# teacher-forcing target id *inside* the kernel via iota one-hot lane reduces,
# so no V- or EV-sized tensor is ever written to HBM.
# --------------------------------------------------------------------------
def _decoder_kernel(gi_ref, m_ref, cg_ref, tgt_ref, z_ref, keys_ref, vals_ref,
                    amask_ref, wid_ref,
                    whh_ref, bhh_ref, wcin_ref,
                    wq_ref, bq_ref, v_ref,
                    wph_ref, wpc_ref, bp_ref, eout_ref,
                    wch_ref, wcc_ref,
                    ptgt_ref, attw_ref, gate_ref,
                    h_scr, c_scr):
    t = pl.program_id(0)
    Z = whh_ref.shape[0]
    V = eout_ref.shape[1]

    @pl.when(t == 0)
    def _():
        h_scr[...] = z_ref[...]                 # init hidden = z
        c_scr[...] = jnp.zeros_like(c_scr)      # TODO(synk): init context assumed zero (init_cont=None)

    gi_pre = gi_ref[0]                          # [bs, 3Z]  emb@W_e + z@W_z + bih
    m = m_ref[0]                                # [bs, 1]
    cg_pre = cg_ref[0]                          # [bs, 1]   emb@Wc_e + bc
    tgt = tgt_ref[0]                            # [bs, 1]   int32 target ids
    h_prev = h_scr[...]
    cont_prev = c_scr[...]

    # GRU cell with split-weight accumulation (no concatenate)
    gi = gi_pre + jnp.dot(cont_prev.astype(BF16), wcin_ref[...],
                          preferred_element_type=F32)
    gh = jnp.dot(h_prev.astype(BF16), whh_ref[...],
                 preferred_element_type=F32) + bhh_ref[...]
    r = jax.nn.sigmoid(gi[:, :Z] + gh[:, :Z])
    u = jax.nn.sigmoid(gi[:, Z:2 * Z] + gh[:, Z:2 * Z])
    n = jnp.tanh(gi[:, 2 * Z:] + r * gh[:, 2 * Z:])
    h_new = (1.0 - u) * n + u * h_prev
    h_bf = h_new.astype(BF16)

    # additive attention over leave-one-out review states
    q = jnp.dot(h_bf, wq_ref[...], preferred_element_type=F32) + bq_ref[...]
    e = jnp.tanh(keys_ref[...].astype(F32) + q[:, None, :])        # [bs, L, A]
    scores = (e * v_ref[...]).sum(-1)                              # [bs, L]
    amask = amask_ref[...]
    scores = jnp.where(amask > 0, scores, jnp.full_like(scores, -1e9))
    scores = scores - scores.max(axis=-1, keepdims=True)
    ex = jnp.exp(scores) * amask
    attw = ex * pl.reciprocal(ex.sum(-1, keepdims=True) + EPS, approx=True)
    cont_new = (attw[:, :, None] * vals_ref[...].astype(F32)).sum(axis=1)

    # generator: split-weight lin_proj -> tied output embeddings -> softmax,
    # evaluated only at the target id (one-hot lane reduce)
    proj = (jnp.dot(h_bf, wph_ref[...], preferred_element_type=F32)
            + jnp.dot(cont_new.astype(BF16), wpc_ref[...],
                      preferred_element_type=F32)
            + bp_ref[...])                                         # [bs, E]
    logits = jnp.dot(proj.astype(BF16), eout_ref[...],
                     preferred_element_type=F32)                   # [bs, V]
    logits = logits - logits.max(axis=-1, keepdims=True)
    gx = jnp.exp(logits)
    inv_den = pl.reciprocal(gx.sum(-1, keepdims=True), approx=True)
    iota_v = jax.lax.broadcasted_iota(jnp.int32, logits.shape, 1)
    gen_onehot = (iota_v == tgt).astype(F32)        # zero if tgt >= V (ext-vocab)
    gen_tgt = (gx * gen_onehot).sum(-1, keepdims=True) * inv_den   # [bs, 1]

    # copy distribution evaluated at the target id
    copy_onehot = (wid_ref[...] == tgt).astype(F32)                # [bs, L]
    copy_tgt = (attw * copy_onehot).sum(-1, keepdims=True)         # [bs, 1]

    # copy gate (single-linear Ffnn assumption, split weights, lane reduce)
    # TODO(synk): Ffnn with hidden_dim=None assumed to be a single Linear.
    glog = ((h_new * wch_ref[...]).sum(-1, keepdims=True)
            + (cont_new * wcc_ref[...]).sum(-1, keepdims=True)
            + cg_pre)
    gate = jax.nn.sigmoid(glog)                                    # [bs, 1]

    ptgt_ref[0] = (1.0 - gate) * gen_tgt + gate * copy_tgt
    attw_ref[0] = attw
    gate_ref[0] = gate

    # TODO(synk): exact GruPointerDecoder carry-masking semantics assumed (mask-gated carry).
    h_scr[...] = m * h_new + (1.0 - m) * h_prev
    c_scr[...] = m * cont_new + (1.0 - m) * cont_prev


def pointer_gru_decode(embds, rev_mask, z, att_keys, att_vals, att_mask,
                       att_word_ids, targets, params, vocab_size):
    bs, S, E = embds.shape
    Z = z.shape[1]
    H = att_vals.shape[2]
    L = att_keys.shape[1]
    A = att_keys.shape[2]
    V = vocab_size

    # --- hoisted, non-recurrent projections (large MXU matmuls once) ---
    dec_wih = params['dec_wih']                 # [E+Z+H, 3Z], split [emb|z|cont]
    w_e, w_z, w_c = dec_wih[:E], dec_wih[E:E + Z], dec_wih[E + Z:]
    gi_pre = pallas_linear(embds.reshape(bs * S, E), w_e,
                           params['dec_bih']).reshape(bs, S, 3 * Z)
    gi_pre = gi_pre + jnp.dot(z, w_z)[:, None, :]          # z part, same all t

    cg_w = params['cg_w']                       # [Z+H+E, 1], split [h|cont|emb]
    wc_h, wc_c, wc_e = cg_w[:Z], cg_w[Z:Z + H], cg_w[Z + H:]
    cg_pre = jnp.dot(embds, wc_e) + params['cg_b'].reshape(1, 1, 1)  # [bs,S,1]

    gen_wp = params['gen_wp']                   # [Z+H, E], split [h|cont]
    wp_h, wp_c = gen_wp[:Z], gen_wp[Z:]
    eout = params['embd'][:V].T                 # [E, V] tied output embeddings

    gi_s = jnp.transpose(gi_pre, (1, 0, 2))
    m_s = jnp.transpose(rev_mask, (1, 0))[:, :, None]
    cg_s = jnp.transpose(cg_pre, (1, 0, 2))
    tgt_s = jnp.transpose(targets.astype(jnp.int32), (1, 0))[:, :, None]

    weights = [
        params['dec_whh'].astype(BF16),                   # [Z, 3Z]
        params['dec_bhh'].reshape(1, -1).astype(F32),     # [1, 3Z]
        w_c.astype(BF16),                                 # [H, 3Z]
        params['att_wq'].astype(BF16),                    # [Z, A]
        params['att_bq'].reshape(1, -1).astype(F32),      # [1, A]
        params['att_v'].reshape(1, -1).astype(F32),       # [1, A]
        wp_h.astype(BF16),                                # [Z, E]
        wp_c.astype(BF16),                                # [H, E]
        params['gen_bp'].reshape(1, -1).astype(F32),      # [1, E]
        eout.astype(BF16),                                # [E, V]
        wc_h.reshape(1, -1).astype(F32),                  # [1, Z]
        wc_c.reshape(1, -1).astype(F32),                  # [1, H]
    ]

    full2 = lambda t: (0, 0)
    full3 = lambda t: (0, 0, 0)
    in_specs = [
        pl.BlockSpec((1, bs, 3 * Z), lambda t: (t, 0, 0)),
        pl.BlockSpec((1, bs, 1), lambda t: (t, 0, 0)),
        pl.BlockSpec((1, bs, 1), lambda t: (t, 0, 0)),
        pl.BlockSpec((1, bs, 1), lambda t: (t, 0, 0)),
        pl.BlockSpec((bs, Z), full2),
        pl.BlockSpec((bs, L, A), full3),
        pl.BlockSpec((bs, L, H), full3),
        pl.BlockSpec((bs, L), full2),
        pl.BlockSpec((bs, L), full2),
    ] + [pl.BlockSpec(w.shape, full2) for w in weights]

    out_specs = [
        pl.BlockSpec((1, bs, 1), lambda t: (t, 0, 0)),
        pl.BlockSpec((1, bs, L), lambda t: (t, 0, 0)),
        pl.BlockSpec((1, bs, 1), lambda t: (t, 0, 0)),
    ]
    out_shape = (jax.ShapeDtypeStruct((S, bs, 1), F32),
                 jax.ShapeDtypeStruct((S, bs, L), F32),
                 jax.ShapeDtypeStruct((S, bs, 1), F32))

    ptgt_s, attw_s, gate_s = pl.pallas_call(
        _decoder_kernel,
        out_shape=out_shape,
        grid=(S,),
        in_specs=in_specs,
        out_specs=out_specs,
        scratch_shapes=[pltpu.VMEM((bs, Z), F32),
                        pltpu.VMEM((bs, H), F32)],
        compiler_params=pltpu.CompilerParams(
            dimension_semantics=("arbitrary",)),
    )(gi_s, m_s, cg_s, tgt_s, z.astype(F32),
      att_keys.astype(BF16), att_vals.astype(BF16), att_mask.astype(F32),
      att_word_ids.astype(jnp.int32),
      *weights)

    return (jnp.transpose(ptgt_s, (1, 0, 2))[:, :, 0],     # [bs, S]
            jnp.transpose(attw_s, (1, 0, 2)),              # [bs, S, L]
            jnp.transpose(gate_s, (1, 0, 2))[:, :, 0])     # [bs, S]


# --------------------------------------------------------------------------
# losses
# --------------------------------------------------------------------------
def kld_normal(mu, sigma):
    return -0.5 * (1.0 + jnp.log(sigma ** 2 + EPS) - mu ** 2 - sigma ** 2).sum(-1)


def kld_gauss(mu_q, sigma_q, mu_p, sigma_p, eps=EPS):
    t = (jnp.log(sigma_p + eps) - jnp.log(sigma_q + eps)
         + (sigma_q ** 2 + (mu_q - mu_p) ** 2) / (2.0 * sigma_p ** 2 + eps) - 0.5)
    return t.sum(-1)


# --------------------------------------------------------------------------
# parameters
# --------------------------------------------------------------------------
def init_params(key, cfg):
    V, EV = cfg['vocab_size'], cfg['ext_vocab_size']
    E, H = cfg['emb_dim'], cfg['enc_hidden_dim']
    C, Z, A = cfg['c_dim'], cfg['z_dim'], cfg['att_hidden_dim']
    SH = cfg['states_sc_hidden']
    D_state = H + E
    dec_in = E + Z + H

    shapes = dict(
        embd=(EV, E),
        enc_wih=(E, 3 * H), enc_bih=(3 * H,), enc_whh=(H, 3 * H), enc_bhh=(3 * H,),
        att_wk=(H, A), att_bk=(A,),
        att_wq=(Z, A), att_bq=(A,), att_v=(A,),
        dec_wih=(dec_in, 3 * Z), dec_bih=(3 * Z,), dec_whh=(Z, 3 * Z), dec_bhh=(3 * Z,),
        gen_wp=(Z + H, E), gen_bp=(E,),
        cg_w=(Z + H + E, 1), cg_b=(1,),
        cs_w1=(D_state, SH), cs_b1=(SH,), cs_w2=(SH, 1), cs_b2=(1,),
        cinf_w=(D_state, 2 * C), cinf_b=(2 * C,),
        zinf_w=(H + C, 2 * Z), zinf_b=(2 * Z,),
        zpri_w=(C, 2 * Z), zpri_b=(2 * Z,),
    )
    params = {}
    names = sorted(shapes)
    for k_, name in zip(jax.random.split(key, len(names)), names):
        params[name] = 0.1 * jax.random.normal(k_, shapes[name], F32)
    return params


# --------------------------------------------------------------------------
# full forward pass
# --------------------------------------------------------------------------
def copycat_forward(params, cfg, rev, rev_len, rev_mask,
                    group_rev_indxs, group_rev_indxs_mask, rev_to_group_indx,
                    other_rev_indxs, other_rev_indxs_mask,
                    other_rev_comp_states, other_rev_comp_states_mask,
                    c_lambd=0.0, z_lambd=0.0, rng=None):
    if rng is None:
        rng = jax.random.PRNGKey(1)
    V = cfg['vocab_size']
    bs, S = rev.shape
    GC = group_rev_indxs.shape[0]

    rev_word_embds = jnp.take(params['embd'], rev, axis=0)         # [bs, S, E]
    E = rev_word_embds.shape[-1]
    H = params['enc_whh'].shape[0]
    A = params['att_wk'].shape[1]

    # encoder (input projection hoisted out of the recurrence)
    gi_enc = pallas_linear(rev_word_embds.reshape(bs * S, E),
                           params['enc_wih'],
                           params['enc_bih']).reshape(bs, S, 3 * H)
    rev_encs, rev_hiddens = gru_encode(gi_enc, rev_mask,
                                       params['enc_whh'], params['enc_bhh'])

    att_keys = pallas_linear(rev_hiddens.reshape(bs * S, H),
                             params['att_wk'],
                             params['att_bk']).reshape(bs, S, A)

    contxt_states = jnp.concatenate([rev_hiddens, rev_word_embds], axis=-1)

    # ---- q(c | group) ----
    grouped_states = contxt_states[group_rev_indxs].reshape(
        GC, -1, contxt_states.shape[-1])
    grouped_mask = (rev_mask[group_rev_indxs]
                    * group_rev_indxs_mask[:, :, None]).reshape(GC, -1)
    ws_state, scor_wts = weighted_state(grouped_states, grouped_mask,
                                        params['cs_w1'], params['cs_b1'],
                                        params['cs_w2'], params['cs_b2'])
    # TODO(synk): MuSigmaFfnn assumed to be a single Linear -> split -> softplus(sigma).
    c_stats = jnp.dot(ws_state, params['cinf_w']) + params['cinf_b']
    C = c_stats.shape[-1] // 2
    c_mu_q, c_sigma_q = c_stats[:, :C], jax.nn.softplus(c_stats[:, C:])
    k1, k2 = jax.random.split(rng)
    c = c_mu_q + c_sigma_q * jax.random.normal(k1, c_mu_q.shape, F32)

    # ---- q(z | review, c) ----
    z_inp = jnp.concatenate([rev_encs, c[rev_to_group_indx]], axis=-1)
    z_stats = jnp.dot(z_inp, params['zinf_w']) + params['zinf_b']
    Z = z_stats.shape[-1] // 2
    z_mu_q, z_sigma_q = z_stats[:, :Z], jax.nn.softplus(z_stats[:, Z:])
    z = z_mu_q + z_sigma_q * jax.random.normal(k2, z_mu_q.shape, F32)

    # ---- leave-one-out attention inputs ----
    rev_att_keys = att_keys[other_rev_indxs].reshape(bs, -1, A)
    rev_att_vals = rev_hiddens[other_rev_indxs].reshape(bs, -1, H)
    sel = jnp.arange(bs)[:, None]
    rev_att_keys = rev_att_keys[sel, other_rev_comp_states]
    rev_att_vals = rev_att_vals[sel, other_rev_comp_states]
    rev_att_mask = other_rev_comp_states_mask
    rev_att_word_ids = rev[other_rev_indxs].reshape(bs, -1)[sel,
                                                            other_rev_comp_states]

    # teacher-forcing targets (shifted-left review ids; last step is a dummy
    # that is masked out of the reconstruction term)
    targets = jnp.concatenate([rev[:, 1:], rev[:, -1:]], axis=1)    # [bs, S]

    # ---- teacher-forced pointer-generator decoding (fused Pallas kernel) ----
    # p_tgt = pointer-mixture probability at the target id, computed in-kernel
    p_tgt_full, rev_att_wts, copy_probs = pointer_gru_decode(
        rev_word_embds, rev_mask, z, rev_att_keys, rev_att_vals, rev_att_mask,
        rev_att_word_ids, targets, params, V)

    # reconstruction (identical to log(word_probs+eps) gathered at targets,
    # without materializing any [bs,S,V]/[bs,S,EV] tensors)
    lp_next = jnp.log(p_tgt_full[:, :-1] + EPS)
    rec_term = (lp_next * rev_mask[:, 1:]).sum(-1)
    avg_rec_term = rec_term.mean()
    loss = -avg_rec_term

    # c KL
    c_kl_term = kld_normal(c_mu_q, c_sigma_q)
    summed_c_kl = c_kl_term.sum()
    avg_c_kl = summed_c_kl / bs
    loss = loss + c_lambd * avg_c_kl

    # z KL against prior p(z | c)
    zp_stats = jnp.dot(c, params['zpri_w']) + params['zpri_b']
    z_mu_p, z_sigma_p = zp_stats[:, :Z], jax.nn.softplus(zp_stats[:, Z:])
    z_kl_term = kld_gauss(z_mu_q, z_sigma_q,
                          z_mu_p[rev_to_group_indx],
                          z_sigma_p[rev_to_group_indx], EPS)
    avg_z_kl = z_kl_term.mean()
    loss = loss + z_lambd * avg_z_kl

    # ---- metrics (device scalars: no float() host sync, jit-friendly) ----
    log_var_p_z = jnp.log(z_sigma_p).sum(-1)
    rev_att_wts_m = rev_att_wts[:, :-1] * rev_mask[:, 1:, None]
    copy_probs_m = copy_probs[:, :-1] * rev_mask[:, 1:]
    metrs = {
        'avg_lb': avg_rec_term - avg_c_kl - avg_z_kl,
        'avg_rec': avg_rec_term,
        'avg_c_kl': summed_c_kl / GC,
        'avg_z_kl': avg_z_kl,
        'avg_log_p_z_var': log_var_p_z.mean(),
        'avg_log_q_z_var': jnp.log(z_sigma_q).sum(-1).mean(),
        'avg_log_q_c_var': jnp.log(c_sigma_q).sum(-1).mean(),
        'avg_att_max': rev_att_wts_m.max(-1).mean(),
        'avg_max_copy_prob': copy_probs_m.max(-1).mean(),
        'avg_copy_prob': (copy_probs_m.sum(-1)
                          / rev_len.astype(F32)).mean(),
        'avg_first_scor_wts': scor_wts[:, 0].mean(),
        'c_lambd': c_lambd,
        'z_lambd': z_lambd,
    }
    return loss, metrs


# --------------------------------------------------------------------------
if __name__ == "__main__":
    key = jax.random.PRNGKey(0)
    cfg = dict(vocab_size=32, ext_vocab_size=40, emb_dim=16, enc_hidden_dim=32,
               c_dim=8, z_dim=16, att_hidden_dim=16, states_sc_hidden=16)
    bs, S, GC, MR = 4, 8, 2, 2

    k_par, k_rev, k_noise = jax.random.split(key, 3)
    params = init_params(k_par, cfg)

    rev = jax.random.randint(k_rev, (bs, S), 1, cfg['ext_vocab_size'],
                             dtype=jnp.int32)
    rev_len = jnp.array([8, 6, 7, 5], dtype=jnp.int32)
    rev_mask = (jnp.arange(S)[None, :] < rev_len[:, None]).astype(F32)

    group_rev_indxs = jnp.array([[0, 1], [2, 3]], dtype=jnp.int32)
    group_rev_indxs_mask = jnp.ones((GC, MR), F32)
    rev_to_group_indx = jnp.array([0, 0, 1, 1], dtype=jnp.int32)

    other_rev_indxs = jnp.array([[1, 0], [0, 0], [3, 0], [2, 0]],
                                dtype=jnp.int32)
    other_rev_indxs_mask = jnp.array([[1., 0.], [1., 0.], [1., 0.], [1., 0.]],
                                     F32)

    cat_rev_len = MR * S
    other_rev_comp_states = jnp.tile(
        jnp.arange(cat_rev_len, dtype=jnp.int32)[None, :], (bs, 1))
    other_rev_comp_states_mask = (
        rev_mask[other_rev_indxs] * other_rev_indxs_mask[:, :, None]
    ).reshape(bs, cat_rev_len)

    loss, metrs = copycat_forward(
        params, cfg, rev, rev_len, rev_mask,
        group_rev_indxs, group_rev_indxs_mask, rev_to_group_indx,
        other_rev_indxs, other_rev_indxs_mask,
        other_rev_comp_states, other_rev_comp_states_mask,
        c_lambd=0.5, z_lambd=0.5, rng=k_noise)

    jax.block_until_ready(loss)
    assert jnp.isfinite(loss), "loss is not finite"
    print("KERNEL_OK")
</pallas_src>

<mosaic_0001>
module attributes {stable_mosaic.version = 11 : i64} {
  func.func @_linear_kernel(%arg0: i32, %arg1: memref<32x16xbf16, #tpu.memory_space<vmem>>, %arg2: memref<16x96xbf16, #tpu.memory_space<vmem>>, %arg3: memref<1x96xf32, #tpu.memory_space<vmem>>, %arg4: memref<32x96xf32, #tpu.memory_space<vmem>>) attributes {dimension_semantics = [#tpu.dimension_semantics<parallel>], iteration_bounds = array<i64: 1>, scalar_prefetch = 0 : i64, scratch_operands = 0 : i64, tpu.core_type = #tpu.core_type<tc>, window_params = [{transform_indices = @transform_0, window_bounds = array<i64: 32, 16>}, {pipeline_mode = #tpu.pipeline_mode<synchronous>, transform_indices = @transform_1, window_bounds = array<i64: 16, 96>}, {pipeline_mode = #tpu.pipeline_mode<synchronous>, transform_indices = @transform_2, window_bounds = array<i64: 1, 96>}, {transform_indices = @transform_3, window_bounds = array<i64: 32, 96>}]} {
    %c0 = arith.constant 0 : index
    %c0_0 = arith.constant 0 : index
    %0 = vector.load %arg1[%c0, %c0_0] : memref<32x16xbf16, #tpu.memory_space<vmem>>, vector<32x16xbf16>
    %c0_1 = arith.constant 0 : index
    %c0_2 = arith.constant 0 : index
    %1 = vector.load %arg2[%c0_1, %c0_2] : memref<16x96xbf16, #tpu.memory_space<vmem>>, vector<16x96xbf16>
    %cst = arith.constant dense<0.000000e+00> : vector<32x96xf32>
    %2 = tpu.matmul %0, %1, %cst {dimension_numbers = #tpu.dot_dimension_numbers<[1], [0], [0], [1], [0, 0, 1, 1], [], []>} : vector<32x16xbf16>, vector<16x96xbf16>, vector<32x96xf32> -> vector<32x96xf32>
    %c0_3 = arith.constant 0 : index
    %c0_4 = arith.constant 0 : index
    %3 = vector.load %arg3[%c0_3, %c0_4] : memref<1x96xf32, #tpu.memory_space<vmem>>, vector<1x96xf32>
    %4 = vector.broadcast %3 : vector<1x96xf32> to vector<32x96xf32>
    %5 = arith.addf %2, %4 : vector<32x96xf32>
    %c0_5 = arith.constant 0 : index
    %c0_6 = arith.constant 0 : index
    %6 = vector.load %arg4[%c0_5, %c0_6] : memref<32x96xf32, #tpu.memory_space<vmem>>, vector<32x96xf32>
    tpu.vector_store %arg4[%c0_5, %c0_6], %5 {strides = array<i32>} : memref<32x96xf32, #tpu.memory_space<vmem>>, vector<32x96xf32>,
    return
  }
  func.func @transform_0(%arg0: i32) -> (i32, i32) {
    %c0_i32 = arith.constant 0 : i32
    %c0_i32_0 = arith.constant 0 : i32
    return %arg0, %c0_i32 : i32, i32
  }
  func.func @transform_1(%arg0: i32) -> (i32, i32) {
    %c0_i32 = arith.constant 0 : i32
    %c0_i32_0 = arith.constant 0 : i32
    %c0_i32_1 = arith.constant 0 : i32
    return %c0_i32, %c0_i32_0 : i32, i32
  }
  func.func @transform_2(%arg0: i32) -> (i32, i32) {
    %c0_i32 = arith.constant 0 : i32
    %c0_i32_0 = arith.constant 0 : i32
    %c0_i32_1 = arith.constant 0 : i32
    return %c0_i32, %c0_i32_0 : i32, i32
  }
  func.func @transform_3(%arg0: i32) -> (i32, i32) {
    %c0_i32 = arith.constant 0 : i32
    %c0_i32_0 = arith.constant 0 : i32
    return %arg0, %c0_i32 : i32, i32
  }
}

</mosaic_0001>

<llo_original>
// kernel: tpu_custom_call.1
$region0: #{tpu_custom_call.1}
  #allocation0 [shape = 'u32[]', space=smem, size = 0x4, offset = 0x4, fixed_abs, tag = 'smem constant byte address 0x4 - core index']
  #allocation1 [shape = 'u32[144,128]{1,0:T(1,128)}', space=vmem, size = 0x12000, scoped, tag = 'internal scratch']
  %s0 = inlined_call_operand.vmem [shape: bf16[32,16], index: 0, kind: input, shape index: {}]
  %s1 = inlined_call_operand.vmem [shape: bf16[16,96], index: 1, kind: input, shape index: {}]
  %s2 = inlined_call_operand.vmem [shape: f32[1,96], index: 2, kind: input, shape index: {}]
  %s3 = inlined_call_operand.hbm [shape: f32[32,96], index: 3, kind: output, shape index: {}]
  %s4 = sld [smem:[#allocation0]]
  $region22: #{tpu_custom_call.1} parent=0
    _
  %s6 = ssub.s32 1, %s4
  %s7 = scalar_select 0, %s6, %s4
  $region1: #{tpu_custom_call.1} parent=0
    #allocation2 [shape = 'u8[16384]{0}', space=vmem, size = 0x4000, scoped, tag = 'output window, operand 0, single buffered']
    #allocation3 [shape = 's32[1]{0}', space=sflag, size = 0x4, scoped, tag = 'scoped memory for tpu_custom_call.1']
    %8 = vsyncpa [#allocation3], 0
    // Predicated region
    $region2: #{tpu_custom_call.1} parent=1 // pred_check
      _
    $region3: #{tpu_custom_call.1} parent=1 // pred_check_branch
      %10 = sbr.rel (0) target = $region5
    $region4: #{tpu_custom_call.1} parent=1 // pred_region
      _
    $region5: #{tpu_custom_call.1} parent=1 // pred_fallthru
      _
    // Predicated region
    $region6: #{tpu_custom_call.1} parent=1 // pred_check
      _
    $region7: #{tpu_custom_call.1} parent=1 // pred_check_branch
      %12 = sbr.rel (0) target = $region9
    $region8: #{tpu_custom_call.1} parent=1 // pred_region
      _
    $region9: #{tpu_custom_call.1} parent=1 // pred_fallthru
      _
    // Predicated region
    $region10: #{tpu_custom_call.1} parent=1 // pred_check
      _
    $region11: #{tpu_custom_call.1} parent=1 // pred_check_branch
      %14 = sbr.rel (0) target = $region13
    $region12: #{tpu_custom_call.1} parent=1 // pred_region
      _
    $region13: #{tpu_custom_call.1} parent=1 // pred_fallthru
      _
    %v16 = vld [vmem:[%s0] sm:$0xf]
    %v17 = vld [vmem:[%s0 + $0x4] sm:$0xf]
    %v18 = vld [vmem:[%s0 + $0x8] sm:$0xf]
    %v19 = vld [vmem:[%s0 + $0xc] sm:$0xf]
    %v20 = vld [vmem:[%s1] sm:$0xf]
    %v21 = vld [vmem:[%s1 + $0x4] sm:$0xf]
    %v22 = vld [vmem:[%s2] sm:$0x1]
    %v24 = vlaneseq
    %v25 = vshrl.u32 %v24, 7
    %v26 = vsub.s32 0, %v25
    %v27 = vrot.slane %v22, %v26
    %v33 = vunpack.c.l.b16 %v16
    %v34 = vunpack.c.l.b16 %v17
    %v35 = vunpack.c.l.b16 %v18
    %v36 = vunpack.c.l.b16 %v19
    %v37 = vpack.c.b16 %v34, %v33
    %v38 = vpack.c.b16 %v36, %v35
    %v41 = vunpack.c.l.b16 %v20
    %v42 = vunpack.c.l.b16 %v21
    %v43 = vpack.c.b16 %v42, %v41
    %vm45 = vcmask 130048
    %v47 = vsel %vm45, %v37, 0
    %v50 = vsel %vm45, %v38, 0
    %52 = vmatprep.subr.bf16.mxu0 0
    %53 = vmatpush1.bf16.msra.mxu0 %v43
    %54 = vmatprep.subr.bf16.mxu0 0
    %55 = vmatpush1.bf16.msra.mxu0 0
    %56 = vmatprep.subr.bf16.mxu0 0
    %57 = vmatpush1.bf16.msra.mxu0 0
    %58 = vmatprep.subr.bf16.mxu0 0
    %59 = vmatpush1.bf16.msra.mxu0 0
    %60 = vmatprep.subr.bf16.mxu0 0
    %61 = vmatpush1.bf16.msra.mxu0 0
    %62 = vmatprep.subr.bf16.mxu0 0
    %63 = vmatpush1.bf16.msra.mxu0 0
    %64 = vmatprep.subr.bf16.mxu0 0
    %65 = vmatpush1.bf16.msra.mxu0 0
    %66 = vmatprep.subr.bf16.mxu0 0
    %67 = vmatpush1.bf16.msra.mxu0 0
    %68 = vmatprep.subr.bf16.mxu0 0
    %69 = vmatpush1.bf16.msra.mxu0 0
    %70 = vmatprep.subr.bf16.mxu0 0
    %71 = vmatpush1.bf16.msra.mxu0 0
    %72 = vmatprep.subr.bf16.mxu0 0
    %73 = vmatpush1.bf16.msra.mxu0 0
    %74 = vmatprep.subr.bf16.mxu0 0
    %75 = vmatpush1.bf16.msra.mxu0 0
    %76 = vmatprep.subr.bf16.mxu0 0
    %77 = vmatpush1.bf16.msra.mxu0 0
    %78 = vmatprep.subr.bf16.mxu0 0
    %79 = vmatpush1.bf16.msra.mxu0 0
    %80 = vmatprep.subr.bf16.mxu0 0
    %81 = vmatpush1.bf16.msra.mxu0 0
    %82 = vmatprep.subr.bf16.mxu0 0
    %83 = vmatpush1.bf16.msra.mxu0 0
    %84 = vmatprep.mubr.bf16.mxu0 0
    %85 = vmatmul.mubr.bf16.gmra.mrb[0].mxu0 %v47
    %v86 = vpop.f32.mrb[0].mxu0
    %v87 = vadd.f32 %v27, %v86
    %v88 = vpop.f32.mrb[0].mxu0
    %v89 = vpop.f32.mrb[0].mxu0
    %v90 = vadd.f32 %v27, %v89
    %v91 = vpop.f32.mrb[0].mxu0
    %92 = vmatprep.mubr.bf16.mxu0 0
    %93 = vmatmul.mubr.bf16.gmra.mrb[0].mxu0 %v50
    %v94 = vpop.f32.mrb[0].mxu0
    %v95 = vadd.f32 %v27, %v94
    %v96 = vpop.f32.mrb[0].mxu0
    %v97 = vpop.f32.mrb[0].mxu0
    %v98 = vadd.f32 %v27, %v97
    %v99 = vpop.f32.mrb[0].mxu0
    %100 = vdwg.mxu0
    %vm101 = vcmask 785408
    %102 = vst.msk [vmem:[#allocation2] sm:$0xff] %vm101, %v87
    %103 = vst.msk [vmem:[#allocation2 + $0x8] sm:$0xff] %vm101, %v90
    %104 = vst.msk [vmem:[#allocation2 + $0x10] sm:$0xff] %vm101, %v95
    %105 = vst.msk [vmem:[#allocation2 + $0x18] sm:$0xff] %vm101, %v98
    // Predicated region
    $region14: #{tpu_custom_call.1} parent=1 // pred_check
      _
    $region15: #{tpu_custom_call.1} parent=1 // pred_check_branch
      %107 = sbr.rel (0) target = $region17
    $region16: #{tpu_custom_call.1} parent=1 // pred_region
      %s109 = ssub.s32 512, 512
      %110 = vsyncadd [#allocation3], %s109
      %s111 = sshll.u32 [#allocation2], 4
      %s112 = int_to_ptr.vmem [resolvable:$true] %s111
      %117 = dma.vmem_to_hbm [thread:$0]  %s112, 512, %s3, [#allocation3], 128, 128, 8
    $region17: #{tpu_custom_call.1} parent=1 // pred_fallthru
      _
    // Predicated region
    $region18: #{tpu_custom_call.1} parent=1 // pred_check
      _
    $region19: #{tpu_custom_call.1} parent=1 // pred_check_branch
      %119 = sbr.rel (0) target = $region21
    $region20: #{tpu_custom_call.1} parent=1 // pred_region
      %120 = dma.done [#allocation3], 512
    $region21: #{tpu_custom_call.1} parent=1 // pred_fallthru
      _
    %121 = vsyncpa [#allocation3], 1

</llo_original>
